<compile_context>
chip_gen: v7x
topology: tpu7x:2x2x1
jax: 0.10.0
libtpu: 0.0.40
codegen_flags: <defaults>
</compile_context>

<pallas_src>
import jax
import jax.numpy as jnp
from jax.experimental import pallas as pl
from jax.experimental.pallas import tpu as pltpu


def _proj_head_kernel(x_ref, w1_ref, s1_ref, w2_ref, b2_ref, o_ref):
    # x_ref:  (Cin,  T)   channel-major pixel slab (lane axis = pixels), f32
    # w1_ref: (Cin,  Cin) conv1 weight with BN scale folded in, bf16
    # s1_ref: (Cin,  1)   folded shift = scale*b1 + beta - mean*scale, f32
    # w2_ref: (Cout, Cin) conv2 weight, bf16
    # b2_ref: (Cout, 1)   conv2 bias, f32
    # o_ref:  (Cout, T)   f32
    x = x_ref[...].astype(w1_ref.dtype)              # f32 -> bf16 in VMEM (VPU, free-ish)
    h = jnp.dot(w1_ref[...], x, preferred_element_type=jnp.float32) + s1_ref[...]
    h = jnp.maximum(h, 0.0)                          # ReLU (f32)
    h = h.astype(w2_ref.dtype)                       # back to bf16 for the MXU
    o = jnp.dot(w2_ref[...], h, preferred_element_type=jnp.float32) + b2_ref[...]
    o_ref[...] = o.astype(o_ref.dtype)


def projection_head_forward(x_nchw, params, *, tile_hw=1024, bn_eps=1e-5,
                            compute_dtype=jnp.bfloat16):
    """x_nchw: (N, Cin, H, W) float32.  Returns (N, Cout, H, W) float32."""
    w1, b1, gamma, beta, run_mean, run_var, w2, b2 = params
    N, Cin, H, W = x_nchw.shape
    Cout = w2.shape[0]
    HW = H * W

    # Pick a lane-aligned (multiple of 128) pixel tile, no larger than needed,
    # and pad HW up to a tile multiple so the grid divides exactly.
    LANE = 128
    hw_rounded = ((HW + LANE - 1) // LANE) * LANE
    tile_hw = max(LANE, (min(int(tile_hw), hw_rounded) // LANE) * LANE)
    hw_pad = ((HW + tile_hw - 1) // tile_hw) * tile_hw

    x3 = x_nchw.reshape(N, Cin, HW)                  # free reshape, stays f32 (cast in-kernel)
    if hw_pad != HW:
        x3 = jnp.pad(x3, ((0, 0), (0, 0), (0, hw_pad - HW)))

    # Fold BN (eval mode) + conv1 bias into the first matmul.
    scale = gamma / jnp.sqrt(run_var + bn_eps)                         # (Cin,)
    w1_m = (w1[:, :, 0, 0] * scale[:, None]).astype(compute_dtype)     # (Cin, Cin)
    s1 = (scale * b1 + beta - run_mean * scale).reshape(Cin, 1)        # (Cin, 1) f32
    s1 = s1.astype(jnp.float32)
    w2_m = w2[:, :, 0, 0].astype(compute_dtype)                        # (Cout, Cin)
    b2_m = b2.reshape(Cout, 1).astype(jnp.float32)                     # (Cout, 1)

    grid = (N, hw_pad // tile_hw)

    # VMEM budget (double-buffered f32 x blocks + f32 out blocks + weights), headroom 4x.
    wbpe = jnp.dtype(compute_dtype).itemsize
    est = (2 * tile_hw * Cin * 4                     # f32 input blocks
           + 2 * tile_hw * Cout * 4                  # f32 output blocks
           + 2 * (Cin * Cin + Cout * Cin) * wbpe     # bf16 weights
           + 2 * (Cin + Cout) * 4)                   # f32 shift / bias
    vmem_limit = int(min(64 * 2 ** 20, max(4 * est, 16 * 2 ** 20)))

    out3 = pl.pallas_call(
        _proj_head_kernel,
        out_shape=jax.ShapeDtypeStruct((N, Cout, hw_pad), jnp.float32),
        grid_spec=pltpu.PrefetchScalarGridSpec(
            num_scalar_prefetch=0,
            grid=grid,
            in_specs=[
                pl.BlockSpec((None, Cin, tile_hw), lambda n, t: (n, 0, t)),
                pl.BlockSpec((Cin, Cin), lambda n, t: (0, 0)),
                pl.BlockSpec((Cin, 1), lambda n, t: (0, 0)),
                pl.BlockSpec((Cout, Cin), lambda n, t: (0, 0)),
                pl.BlockSpec((Cout, 1), lambda n, t: (0, 0)),
            ],
            out_specs=pl.BlockSpec((None, Cout, tile_hw), lambda n, t: (n, 0, t)),
        ),
        compiler_params=pltpu.CompilerParams(
            dimension_semantics=("parallel", "parallel"),
            vmem_limit_bytes=vmem_limit),
    )(x3, w1_m, s1, w2_m, b2_m)

    # (N, Cout, hw_pad) -> (N, Cout, H, W): slice off pad, free reshape, no transpose.
    return out3[:, :, :HW].reshape(N, Cout, H, W)


def _reference_forward(x_nchw, params, bn_eps=1e-5):
    """Pure-JAX f32 reference (matches PyTorch eval-mode forward)."""
    w1, b1, gamma, beta, run_mean, run_var, w2, b2 = params
    h = jnp.einsum("nchw,oc->nohw", x_nchw, w1[:, :, 0, 0]) + b1[None, :, None, None]
    h = ((h - run_mean[None, :, None, None])
         / jnp.sqrt(run_var[None, :, None, None] + bn_eps)
         * gamma[None, :, None, None] + beta[None, :, None, None])
    h = jnp.maximum(h, 0.0)
    o = jnp.einsum("nchw,oc->nohw", h, w2[:, :, 0, 0]) + b2[None, :, None, None]
    return o


def init_params(key, dim_in, proj_dim):
    ks = jax.random.split(key, 8)
    w1 = jax.random.normal(ks[0], (dim_in, dim_in, 1, 1), jnp.float32) * 0.1
    b1 = jax.random.normal(ks[1], (dim_in,), jnp.float32) * 0.05
    gamma = jnp.ones((dim_in,), jnp.float32) + 0.1 * jax.random.normal(ks[2], (dim_in,))
    beta = 0.05 * jax.random.normal(ks[3], (dim_in,))
    run_mean = 0.1 * jax.random.normal(ks[4], (dim_in,))
    run_var = jnp.abs(1.0 + 0.1 * jax.random.normal(ks[5], (dim_in,)))
    w2 = jax.random.normal(ks[6], (proj_dim, dim_in, 1, 1), jnp.float32) * 0.1
    b2 = jax.random.normal(ks[7], (proj_dim,), jnp.float32) * 0.05
    return (w1, b1, gamma, beta, run_mean, run_var, w2, b2)


if __name__ == "__main__":
    key = jax.random.PRNGKey(0)
    N, Cin, H, W = 2, 16, 16, 16        # HW = 256 per image
    proj_dim = 32

    kx, kp = jax.random.split(key)
    x = jax.random.normal(kx, (N, Cin, H, W), jnp.float32)
    params = init_params(kp, Cin, proj_dim)

    out = projection_head_forward(x, params)         # bf16 MXU operands, f32 accum
    out = jax.block_until_ready(out)

    ref = _reference_forward(x, params)
    assert out.shape == (N, proj_dim, H, W)
    # bf16 operands (f32 accumulation) -> loosened tolerance vs the f32 reference.
    assert jnp.allclose(out, ref, atol=5e-2, rtol=5e-2), "mismatch vs reference"

    print("KERNEL_OK")
</pallas_src>

<mosaic_0001>
module attributes {stable_mosaic.version = 11 : i64} {
  func.func @_proj_head_kernel(%arg0: i32, %arg1: i32, %arg2: memref<1x16x256xf32, #tpu.memory_space<vmem>>, %arg3: memref<16x16xbf16, #tpu.memory_space<vmem>>, %arg4: memref<16x1xf32, #tpu.memory_space<vmem>>, %arg5: memref<32x16xbf16, #tpu.memory_space<vmem>>, %arg6: memref<32x1xf32, #tpu.memory_space<vmem>>, %arg7: memref<1x32x256xf32, #tpu.memory_space<vmem>>) attributes {dimension_semantics = [#tpu.dimension_semantics<parallel>, #tpu.dimension_semantics<parallel>], iteration_bounds = array<i64: 2, 1>, scalar_prefetch = 0 : i64, scratch_operands = 0 : i64, tpu.core_type = #tpu.core_type<tc>, window_params = [{transform_indices = @transform_0, window_bounds = array<i64: 1, 16, 256>}, {pipeline_mode = #tpu.pipeline_mode<synchronous>, transform_indices = @transform_1, window_bounds = array<i64: 16, 16>}, {pipeline_mode = #tpu.pipeline_mode<synchronous>, transform_indices = @transform_2, window_bounds = array<i64: 16, 1>}, {pipeline_mode = #tpu.pipeline_mode<synchronous>, transform_indices = @transform_3, window_bounds = array<i64: 32, 16>}, {pipeline_mode = #tpu.pipeline_mode<synchronous>, transform_indices = @transform_4, window_bounds = array<i64: 32, 1>}, {transform_indices = @transform_5, window_bounds = array<i64: 1, 32, 256>}]} {
    %c0 = arith.constant 0 : index
    %c0_0 = arith.constant 0 : index
    %c0_1 = arith.constant 0 : index
    %0 = vector.load %arg2[%c0, %c0_0, %c0_1] : memref<1x16x256xf32, #tpu.memory_space<vmem>>, vector<1x16x256xf32>
    %1 = vector.shape_cast %0 : vector<1x16x256xf32> to vector<16x256xf32>
    %2 = arith.truncf %1 : vector<16x256xf32> to vector<16x256xbf16>
    %c0_2 = arith.constant 0 : index
    %c0_3 = arith.constant 0 : index
    %3 = vector.load %arg3[%c0_2, %c0_3] : memref<16x16xbf16, #tpu.memory_space<vmem>>, vector<16x16xbf16>
    %cst = arith.constant dense<0.000000e+00> : vector<16x256xf32>
    %4 = tpu.matmul %3, %2, %cst {dimension_numbers = #tpu.dot_dimension_numbers<[1], [0], [0], [1], [0, 0, 1, 1], [], []>} : vector<16x16xbf16>, vector<16x256xbf16>, vector<16x256xf32> -> vector<16x256xf32>
    %c0_4 = arith.constant 0 : index
    %c0_5 = arith.constant 0 : index
    %5 = vector.load %arg4[%c0_4, %c0_5] : memref<16x1xf32, #tpu.memory_space<vmem>>, vector<16x1xf32>
    %6 = vector.broadcast %5 : vector<16x1xf32> to vector<16x256xf32>
    %7 = arith.addf %4, %6 : vector<16x256xf32>
    %cst_6 = arith.constant 0.000000e+00 : f32
    %8 = vector.broadcast %cst_6 : f32 to vector<16x256xf32>
    %9 = arith.maximumf %7, %8 : vector<16x256xf32>
    %10 = arith.truncf %9 : vector<16x256xf32> to vector<16x256xbf16>
    %c0_7 = arith.constant 0 : index
    %c0_8 = arith.constant 0 : index
    %11 = vector.load %arg5[%c0_7, %c0_8] : memref<32x16xbf16, #tpu.memory_space<vmem>>, vector<32x16xbf16>
    %cst_9 = arith.constant dense<0.000000e+00> : vector<32x256xf32>
    %12 = tpu.matmul %11, %10, %cst_9 {dimension_numbers = #tpu.dot_dimension_numbers<[1], [0], [0], [1], [0, 0, 1, 1], [], []>} : vector<32x16xbf16>, vector<16x256xbf16>, vector<32x256xf32> -> vector<32x256xf32>
    %c0_10 = arith.constant 0 : index
    %c0_11 = arith.constant 0 : index
    %13 = vector.load %arg6[%c0_10, %c0_11] : memref<32x1xf32, #tpu.memory_space<vmem>>, vector<32x1xf32>
    %14 = vector.broadcast %13 : vector<32x1xf32> to vector<32x256xf32>
    %15 = arith.addf %12, %14 : vector<32x256xf32>
    %c0_12 = arith.constant 0 : index
    %c0_13 = arith.constant 0 : index
    %c0_14 = arith.constant 0 : index
    %16 = vector.load %arg7[%c0_12, %c0_13, %c0_14] : memref<1x32x256xf32, #tpu.memory_space<vmem>>, vector<1x32x256xf32>
    %17 = vector.shape_cast %16 : vector<1x32x256xf32> to vector<32x256xf32>
    %18 = vector.shape_cast %15 : vector<32x256xf32> to vector<1x32x256xf32>
    tpu.vector_store %arg7[%c0_12, %c0_13, %c0_14], %18 {strides = array<i32>} : memref<1x32x256xf32, #tpu.memory_space<vmem>>, vector<1x32x256xf32>,
    return
  }
  func.func @transform_0(%arg0: i32, %arg1: i32) -> (i32, i32, i32) {
    %c0_i32 = arith.constant 0 : i32
    %c0_i32_0 = arith.constant 0 : i32
    return %arg0, %c0_i32, %arg1 : i32, i32, i32
  }
  func.func @transform_1(%arg0: i32, %arg1: i32) -> (i32, i32) {
    %c0_i32 = arith.constant 0 : i32
    %c0_i32_0 = arith.constant 0 : i32
    %c0_i32_1 = arith.constant 0 : i32
    return %c0_i32, %c0_i32_0 : i32, i32
  }
  func.func @transform_2(%arg0: i32, %arg1: i32) -> (i32, i32) {
    %c0_i32 = arith.constant 0 : i32
    %c0_i32_0 = arith.constant 0 : i32
    %c0_i32_1 = arith.constant 0 : i32
    return %c0_i32, %c0_i32_0 : i32, i32
  }
  func.func @transform_3(%arg0: i32, %arg1: i32) -> (i32, i32) {
    %c0_i32 = arith.constant 0 : i32
    %c0_i32_0 = arith.constant 0 : i32
    %c0_i32_1 = arith.constant 0 : i32
    return %c0_i32, %c0_i32_0 : i32, i32
  }
  func.func @transform_4(%arg0: i32, %arg1: i32) -> (i32, i32) {
    %c0_i32 = arith.constant 0 : i32
    %c0_i32_0 = arith.constant 0 : i32
    %c0_i32_1 = arith.constant 0 : i32
    return %c0_i32, %c0_i32_0 : i32, i32
  }
  func.func @transform_5(%arg0: i32, %arg1: i32) -> (i32, i32, i32) {
    %c0_i32 = arith.constant 0 : i32
    %c0_i32_0 = arith.constant 0 : i32
    return %arg0, %c0_i32, %arg1 : i32, i32, i32
  }
}

</mosaic_0001>

<llo_original>
// kernel: tpu_custom_call.1
$region0: #{tpu_custom_call.1}
  #allocation0 [shape = 'u32[]', space=smem, size = 0x4, offset = 0x4, fixed_abs, tag = 'smem constant byte address 0x4 - core index']
  #allocation1 [shape = 'u32[144,128]{1,0:T(1,128)}', space=vmem, size = 0x12000, scoped, tag = 'internal scratch']
  %s0 = inlined_call_operand.vmem [shape: f32[2,16,256], index: 0, kind: input, shape index: {}]
  %s1 = inlined_call_operand.hbm [shape: bf16[16,16], index: 1, kind: input, shape index: {}]
  %s2 = inlined_call_operand.vmem [shape: f32[16,1], index: 2, kind: input, shape index: {}]
  %s3 = inlined_call_operand.vmem [shape: bf16[32,16], index: 3, kind: input, shape index: {}]
  %s4 = inlined_call_operand.vmem [shape: f32[32,1], index: 4, kind: input, shape index: {}]
  %s5 = inlined_call_operand.hbm [shape: f32[2,32,256], index: 5, kind: output, shape index: {}]
  %s6 = sld [smem:[#allocation0]]
  $region57: #{tpu_custom_call.1} parent=0
    _
  %s8 = ssub.s32 1, %s6
  %s9 = scalar_select 0, %s8, %s6
  $region1: #{tpu_custom_call.1} parent=0
    #allocation2 [shape = 'u8[4096]{0}', space=vmem, size = 0x1000, scoped, tag = 'input window, operand 1, single buffered']
    #allocation3 [shape = 's32[2]{0}', space=sflag, size = 0x8, scoped, tag = 'scoped memory for tpu_custom_call.1']
    #allocation4 [shape = 's32[2]{0}', space=sflag, size = 0x8, scoped, tag = 'scoped memory for tpu_custom_call.1']
    #allocation5 [shape = 'u8[65536]{0}', space=vmem, size = 0x10000, scoped, tag = 'output window, operand 0']
    %10 = vsyncpa [#allocation3], 0
    %11 = vsyncpa [#allocation4], 0
    %s12 = scalar_lea.sflag [#allocation4], 1
    %13 = vsyncpa %s12, 0
    loop: start=0, step=1, limit=4
    $region2: #{tpu_custom_call.1} parent=1 // loop_pre_header
      _
    $region3: #{tpu_custom_call.1} parent=1 // loop_header
      %s15 = sphi 0, %s19
      %p16 = scmp.ge.s32.totalorder %s15, 4
      %s22 = sphi 0, %s34
      %s23 = sphi 0, %s30
      %s24 = sphi 0, %s22
      %s25 = sphi 0, %s23
      %s26 = sphi 0, %s24
      %s27 = sphi 0, %s25
      %s39 = sphi 0, %s41
      %s42 = sphi 0, %s39
      %s43 = sphi 0, %s42
      %s59 = sphi 0, %s43
      %s63 = sphi 0, %s63
      %s65 = sphi 0, %s63
      %s66 = sphi 0, %s65
      %s80 = sphi 0, %s66
      %s84 = sphi 0, %s84
      %s86 = sphi 0, %s84
      %s87 = sphi 0, %s86
      %s101 = sphi 0, %s87
      %s105 = sphi 0, %s105
      %s107 = sphi 0, %s105
      %s108 = sphi 0, %s107
      %s122 = sphi 0, %s108
      %s126 = sphi 0, %s126
      %s128 = sphi 0, %s126
      %s129 = sphi 0, %s128
      %s143 = sphi 0, %s129
      %s151 = sphi 0, %s153
      %s154 = sphi 0, %s151
      %s155 = sphi 0, %s154
      %s171 = sphi 0, %s155
    $region4: #{tpu_custom_call.1} parent=1 // loop_header_branch
      %18 = sbr.rel (%p16) target = $region8
    $region5: #{tpu_custom_call.1} parent=1 // loop_body
      %s20 = ssub.s32 %s15, 1
      %s21 = ssub.s32 %s15, 2
      %s28 = sadd.s32 1, %s23
      %p29 = scmp.ge.s32.totalorder %s28, 1
      %s30 = scalar_select %p29, 0, %s28
      %s31 = sadd.s32 1, %s22
      %s32 = scalar_select %p29, %s31, %s22
      %p33 = scmp.ge.s32.totalorder %s32, 2
      %s34 = scalar_select %p33, 0, %s32
      %s35 = ssub.s32 %s22, %s34
      %s36 = ssub.s32 %s23, %s30
      %s37 = sor.u32 %s35, %s36
      %p38 = scmp.eq.s32.totalorder %s37, 0
      %s40 = sadd.s32 %s39, 1
      %s41 = scalar_select %p38, %s39, %s40
      %p44 = pneg %p38
      %p45 = scmp.eq.s32.totalorder %s15, 1
      %p46 = por %p44, %p45
      %p47 = scmp.ne.s32.totalorder %s39, %s42
      %p48 = scmp.eq.s32.totalorder %s15, 0
      %p49 = por %p47, %p48
      %p50 = scmp.ne.s32.totalorder %s39, %s42
      %p51 = scmp.eq.s32.totalorder %s20, 1
      %p52 = por %p50, %p51
      %p53 = scmp.ne.s32.totalorder %s42, %s43
      %p54 = scmp.eq.s32.totalorder %s20, 0
      %p55 = por %p53, %p54
      %p56 = scmp.ne.s32.totalorder %s42, %s43
      %p57 = scmp.eq.s32.totalorder %s21, 1
      %p58 = por %p56, %p57
      %p60 = scmp.ne.s32.totalorder %s43, %s59
      %p61 = scmp.eq.s32.totalorder %s21, 0
      %p62 = por %p60, %p61
      %s64 = sadd.s32 %s63, 1
      %p67 = scmp.eq.s32.totalorder %s15, 1
      %p68 = scmp.ne.s32.totalorder %s63, %s65
      %p69 = scmp.eq.s32.totalorder %s15, 0
      %p70 = por %p68, %p69
      %p71 = scmp.ne.s32.totalorder %s63, %s65
      %p72 = scmp.eq.s32.totalorder %s20, 1
      %p73 = por %p71, %p72
      %p74 = scmp.ne.s32.totalorder %s65, %s66
      %p75 = scmp.eq.s32.totalorder %s20, 0
      %p76 = por %p74, %p75
      %p77 = scmp.ne.s32.totalorder %s65, %s66
      %p78 = scmp.eq.s32.totalorder %s21, 1
      %p79 = por %p77, %p78
      %p81 = scmp.ne.s32.totalorder %s66, %s80
      %p82 = scmp.eq.s32.totalorder %s21, 0
      %p83 = por %p81, %p82
      %s85 = sadd.s32 %s84, 1
      %p88 = scmp.eq.s32.totalorder %s15, 1
      %p89 = scmp.ne.s32.totalorder %s84, %s86
      %p90 = scmp.eq.s32.totalorder %s15, 0
      %p91 = por %p89, %p90
      %p92 = scmp.ne.s32.totalorder %s84, %s86
      %p93 = scmp.eq.s32.totalorder %s20, 1
      %p94 = por %p92, %p93
      %p95 = scmp.ne.s32.totalorder %s86, %s87
      %p96 = scmp.eq.s32.totalorder %s20, 0
      %p97 = por %p95, %p96
      %p98 = scmp.ne.s32.totalorder %s86, %s87
      %p99 = scmp.eq.s32.totalorder %s21, 1
      %p100 = por %p98, %p99
      %p102 = scmp.ne.s32.totalorder %s87, %s101
      %p103 = scmp.eq.s32.totalorder %s21, 0
      %p104 = por %p102, %p103
      %s106 = sadd.s32 %s105, 1
      %p109 = scmp.eq.s32.totalorder %s15, 1
      %p110 = scmp.ne.s32.totalorder %s105, %s107
      %p111 = scmp.eq.s32.totalorder %s15, 0
      %p112 = por %p110, %p111
      %p113 = scmp.ne.s32.totalorder %s105, %s107
      %p114 = scmp.eq.s32.totalorder %s20, 1
      %p115 = por %p113, %p114
      %p116 = scmp.ne.s32.totalorder %s107, %s108
      %p117 = scmp.eq.s32.totalorder %s20, 0
      %p118 = por %p116, %p117
      %p119 = scmp.ne.s32.totalorder %s107, %s108
      %p120 = scmp.eq.s32.totalorder %s21, 1
      %p121 = por %p119, %p120
      %p123 = scmp.ne.s32.totalorder %s108, %s122
      %p124 = scmp.eq.s32.totalorder %s21, 0
      %p125 = por %p123, %p124
      %s127 = sadd.s32 %s126, 1
      %p130 = scmp.eq.s32.totalorder %s15, 1
      %p131 = scmp.ne.s32.totalorder %s126, %s128
      %p132 = scmp.eq.s32.totalorder %s15, 0
      %p133 = por %p131, %p132
      %p134 = scmp.ne.s32.totalorder %s126, %s128
      %p135 = scmp.eq.s32.totalorder %s20, 1
      %p136 = por %p134, %p135
      %p137 = scmp.ne.s32.totalorder %s128, %s129
      %p138 = scmp.eq.s32.totalorder %s20, 0
      %p139 = por %p137, %p138
      %p140 = scmp.ne.s32.totalorder %s128, %s129
      %p141 = scmp.eq.s32.totalorder %s21, 1
      %p142 = por %p140, %p141
      %p144 = scmp.ne.s32.totalorder %s129, %s143
      %p145 = scmp.eq.s32.totalorder %s21, 0
      %p146 = por %p144, %p145
      %s147 = ssub.s32 %s22, %s34
      %s148 = ssub.s32 %s23, %s30
      %s149 = sor.u32 %s147, %s148
      %p150 = scmp.eq.s32.totalorder %s149, 0
      %s152 = sadd.s32 %s151, 1
      %s153 = scalar_select %p150, %s151, %s152
      %p156 = pneg %p150
      %p157 = scmp.eq.s32.totalorder %s15, 1
      %p158 = por %p156, %p157
      %p159 = scmp.ne.s32.totalorder %s151, %s154
      %p160 = scmp.eq.s32.totalorder %s15, 0
      %p161 = por %p159, %p160
      %p162 = scmp.ne.s32.totalorder %s151, %s154
      %p163 = scmp.eq.s32.totalorder %s20, 1
      %p164 = por %p162, %p163
      %p165 = scmp.ne.s32.totalorder %s154, %s155
      %p166 = scmp.eq.s32.totalorder %s20, 0
      %p167 = por %p165, %p166
      %p168 = scmp.ne.s32.totalorder %s154, %s155
      %p169 = scmp.eq.s32.totalorder %s21, 1
      %p170 = por %p168, %p169
      %p172 = scmp.ne.s32.totalorder %s155, %s171
      %p173 = scmp.eq.s32.totalorder %s21, 0
      %p174 = por %p172, %p173
      %p175 = scmp.le.s32.totalorder 1, %s15
      %p176 = scmp.lt.s32.totalorder %s15, 3
      %p177 = pnand %p175, %p176
      %p178 = pneg %p177
      // Predicated region
      $region9: #{tpu_custom_call.1} parent=5 // pred_check
        _
      $region10: #{tpu_custom_call.1} parent=5 // pred_check_branch
        %180 = sbr.rel (%p177) target = $region12
      $region11: #{tpu_custom_call.1} parent=5 // pred_region
        %s181 = ssub.s32 %s15, 1
        // Predicated region
        $region13: #{tpu_custom_call.1} parent=11 // pred_check
          %p182 = pneg %p76
        $region14: #{tpu_custom_call.1} parent=11 // pred_check_branch
          %184 = sbr.rel (%p182) target = $region16
        $region15: #{tpu_custom_call.1} parent=11 // pred_region
          %s186 = ssub.s32 128, 128
          %187 = vsyncadd [#allocation3], %s186
          %s188 = sshll.u32 [#allocation2], 4
          %s189 = int_to_ptr.vmem [resolvable:$true] %s188
          %194 = dma.hbm_to_vmem [thread:$0]  %s1, 128, %s189, [#allocation3], 64, 64, 4
        $region16: #{tpu_custom_call.1} parent=11 // pred_fallthru
          _
        // Predicated region
        $region17: #{tpu_custom_call.1} parent=11 // pred_check
          %p195 = pneg %p97
        $region18: #{tpu_custom_call.1} parent=11 // pred_check_branch
          %197 = sbr.rel (%p195) target = $region20
        $region19: #{tpu_custom_call.1} parent=11 // pred_region
          _
        $region20: #{tpu_custom_call.1} parent=11 // pred_fallthru
          _
        // Predicated region
        $region21: #{tpu_custom_call.1} parent=11 // pred_check
          %p198 = pneg %p118
        $region22: #{tpu_custom_call.1} parent=11 // pred_check_branch
          %200 = sbr.rel (%p198) target = $region24
        $region23: #{tpu_custom_call.1} parent=11 // pred_region
          _
        $region24: #{tpu_custom_call.1} parent=11 // pred_fallthru
          _
        // Predicated region
        $region25: #{tpu_custom_call.1} parent=11 // pred_check
          %p201 = pneg %p139
        $region26: #{tpu_custom_call.1} parent=11 // pred_check_branch
          %203 = sbr.rel (%p201) target = $region28
        $region27: #{tpu_custom_call.1} parent=11 // pred_region
          _
        $region28: #{tpu_custom_call.1} parent=11 // pred_fallthru
          _
      $region12: #{tpu_custom_call.1} parent=5 // pred_fallthru
        _
      %p204 = scmp.lt.s32.totalorder %s15, 2
      // Predicated region
      $region29: #{tpu_custom_call.1} parent=5 // pred_check
        %p205 = pneg %p204
      $region30: #{tpu_custom_call.1} parent=5 // pred_check_branch
        %207 = sbr.rel (%p205) target = $region32
      $region31: #{tpu_custom_call.1} parent=5 // pred_region
        // Predicated region
        $region33: #{tpu_custom_call.1} parent=31 // pred_check
          %p208 = pneg %p49
        $region34: #{tpu_custom_call.1} parent=31 // pred_check_branch
          %210 = sbr.rel (%p208) target = $region36
        $region35: #{tpu_custom_call.1} parent=31 // pred_region
          %s211 = smul.u32 2, %s23
          %p212 = scmp.lt.s32.totalorder %s22, 1
          %s213 = scalar_select %p212, %s22, 1
          %p214 = scmp.lt.s32.totalorder %s211, 1
          %s215 = scalar_select %p214, %s211, 1
          %s216 = smul.addr %s213, 4
          %s217 = sadd.s32 %s215, %s216
          %s218 = smul.addr %s217, 8
          %s219 = scalar_lea.vmem %s0, %s218
          %s220 = smul.u32 2, %s23
        $region36: #{tpu_custom_call.1} parent=31 // pred_fallthru
          _
      $region32: #{tpu_custom_call.1} parent=5 // pred_fallthru
        _
      %p221 = scmp.le.s32.totalorder 1, %s15
      %p222 = scmp.lt.s32.totalorder %s15, 3
      %p223 = pnand %p221, %p222
      %p224 = pneg %p223
      // Predicated region
      $region37: #{tpu_custom_call.1} parent=5 // pred_check
        _
      $region38: #{tpu_custom_call.1} parent=5 // pred_check_branch
        %226 = sbr.rel (%p223) target = $region40
      $region39: #{tpu_custom_call.1} parent=5 // pred_region
        %s227 = ssub.s32 %s15, 1
        // Predicated region
        $region41: #{tpu_custom_call.1} parent=39 // pred_check
          %p228 = pneg %p76
        $region42: #{tpu_custom_call.1} parent=39 // pred_check_branch
          %230 = sbr.rel (%p228) target = $region44
        $region43: #{tpu_custom_call.1} parent=39 // pred_region
          %231 = dma.done [#allocation3], 128
        $region44: #{tpu_custom_call.1} parent=39 // pred_fallthru
          _
        %s232 = smul.u32 2, %s25
        %p233 = scmp.lt.s32.totalorder %s24, 1
        %s234 = scalar_select %p233, %s24, 1
        %p235 = scmp.lt.s32.totalorder %s232, 1
        %s236 = scalar_select %p235, %s232, 1
        %s237 = smul.addr %s234, 4
        %s238 = sadd.s32 %s236, %s237
        %s239 = smul.addr %s238, 8
        %s240 = scalar_lea.vmem %s0, %s239
        %p241 = pneg %p55
        %p242 = pneg %p52
        %p243 = pneg %p76
        %p244 = pneg %p73
        %p245 = pneg %p97
        %p246 = pneg %p94
        %p247 = pneg %p118
        %p248 = pneg %p115
        %p249 = pneg %p139
        %p250 = pneg %p136
        %p251 = pneg %p167
        %p252 = pneg %p164
        %s253 = sand.u32 %s154, 1
        %s254 = scalar_lea.sflag [#allocation4], %s253
        %s255 = sand.u32 %s154, 1
        %s256 = smul.addr %s255, 64
        %s257 = scalar_lea.vmem [#allocation5], %s256
        %s258 = smul.u32 2, %s25
        %p259 = scmp.lt.s32.totalorder %s24, 1
        %s260 = scalar_select %p259, %s24, 1
        %p261 = scmp.lt.s32.totalorder %s258, 1
        %s262 = scalar_select %p261, %s258, 1
        %s263 = smul.addr %s260, 4
        %s264 = sadd.s32 %s262, %s263
        %s265 = smul.addr %s264, 8
        %s266 = scalar_lea.vmem %s0, %s265
        %s267 = smul.u32 2, %s25
        %s268 = smul.u32 2, %s25
        %v270 = vld [vmem:[%s266] sm:$0xff]
        %v271 = vld [vmem:[%s266 + $0x8] sm:$0xff]
        %v272 = vld [vmem:[%s266 + $0x10] sm:$0xff]
        %v273 = vld [vmem:[%s266 + $0x18] sm:$0xff]
        %v274 = vpack.c.bf16 %v272, %v270
        %v275 = vpack.c.bf16 %v273, %v271
        %v276 = vld [vmem:[#allocation2] sm:$0xf]
        %v277 = vld [vmem:[#allocation2 + $0x4] sm:$0xf]
        %v278 = vld [vmem:[%s2] sm:$0xff]
        %v279 = vld [vmem:[%s2 + $0x8] sm:$0xff]
        %281 = vset.pattern.permute.xlu0 0
        %282 = vperm.xlu0 %281, %v278
        %v283 = vpop.permute.xlu0 %282
        %286 = vset.pattern.permute.xlu0 0
        %287 = vperm.xlu0 %286, %v279
        %v288 = vpop.permute.xlu0 %287
        %v292 = vunpack.c.l.b16 %v276
        %v293 = vunpack.c.l.b16 %v277
        %v294 = vpack.c.b16 %v293, %v292
        %vm295 = vcmask 130048
        %v297 = vsel %vm295, %v294, 0
        %299 = vmatprep.subr.bf16.mxu0 %v275
        %300 = vmatpush1.bf16.msra.mxu0 %v274
        %301 = vmatprep.subr.bf16.mxu0 0
        %302 = vmatpush1.bf16.msra.mxu0 0
        %303 = vmatprep.subr.bf16.mxu0 0
        %304 = vmatpush1.bf16.msra.mxu0 0
        %305 = vmatprep.subr.bf16.mxu0 0
        %306 = vmatpush1.bf16.msra.mxu0 0
        %307 = vmatprep.subr.bf16.mxu0 0
        %308 = vmatpush1.bf16.msra.mxu0 0
        %309 = vmatprep.subr.bf16.mxu0 0
        %310 = vmatpush1.bf16.msra.mxu0 0
        %311 = vmatprep.subr.bf16.mxu0 0
        %312 = vmatpush1.bf16.msra.mxu0 0
        %313 = vmatprep.subr.bf16.mxu0 0
        %314 = vmatpush1.bf16.msra.mxu0 0
        %315 = vmatprep.subr.bf16.mxu0 0
        %316 = vmatpush1.bf16.msra.mxu0 0
        %317 = vmatprep.subr.bf16.mxu0 0
        %318 = vmatpush1.bf16.msra.mxu0 0
        %319 = vmatprep.subr.bf16.mxu0 0
        %320 = vmatpush1.bf16.msra.mxu0 0
        %321 = vmatprep.subr.bf16.mxu0 0
        %322 = vmatpush1.bf16.msra.mxu0 0
        %323 = vmatprep.subr.bf16.mxu0 0
        %324 = vmatpush1.bf16.msra.mxu0 0
        %325 = vmatprep.subr.bf16.mxu0 0
        %326 = vmatpush1.bf16.msra.mxu0 0
        %327 = vmatprep.subr.bf16.mxu0 0
        %328 = vmatpush1.bf16.msra.mxu0 0
        %329 = vmatprep.subr.bf16.mxu0 0
        %330 = vmatpush1.bf16.msra.mxu0 0
        %331 = vmatprep.mubr.bf16.mxu0 0
        %332 = vmatmul.mubr.bf16.gmra.mrb[0].mxu0 %v297
        %v333 = vpop.f32.mrb[0].mxu0
        %v334 = vadd.f32 %v283, %v333
        %v335 = vpop.f32.mrb[0].mxu0
        %v336 = vadd.f32 %v283, %v335
        %v337 = vpop.f32.mrb[0].mxu0
        %v338 = vadd.f32 %v288, %v337
        %v339 = vpop.f32.mrb[0].mxu0
        %v340 = vadd.f32 %v288, %v339
        %341 = vdwg.mxu0
        %v342 = vmax.f32 %v334, 0.0
        %v343 = vmax.f32 %v336, 0.0
        %v344 = vmax.f32 %v338, 0.0
        %v345 = vmax.f32 %v340, 0.0
        %v346 = vpack.c.bf16 %v344, %v342
        %v347 = vpack.c.bf16 %v345, %v343
        %v348 = vld [vmem:[%s3] sm:$0xf]
        %v349 = vld [vmem:[%s3 + $0x4] sm:$0xf]
        %v350 = vld [vmem:[%s3 + $0x8] sm:$0xf]
        %v351 = vld [vmem:[%s3 + $0xc] sm:$0xf]
        %v352 = vld [vmem:[%s4] sm:$0xff]
        %v353 = vld [vmem:[%s4 + $0x8] sm:$0xff]
        %v354 = vld [vmem:[%s4 + $0x10] sm:$0xff]
        %v355 = vld [vmem:[%s4 + $0x18] sm:$0xff]
        %357 = vset.pattern.permute.xlu0 0
        %358 = vperm.xlu0 %357, %v352
        %v359 = vpop.permute.xlu0 %358
        %362 = vset.pattern.permute.xlu0 0
        %363 = vperm.xlu0 %362, %v353
        %v364 = vpop.permute.xlu0 %363
        %367 = vset.pattern.permute.xlu0 0
        %368 = vperm.xlu0 %367, %v354
        %v369 = vpop.permute.xlu0 %368
        %372 = vset.pattern.permute.xlu0 0
        %373 = vperm.xlu0 %372, %v355
        %v374 = vpop.permute.xlu0 %373
        %v380 = vunpack.c.l.b16 %v348
        %v381 = vunpack.c.l.b16 %v349
        %v382 = vunpack.c.l.b16 %v350
        %v383 = vunpack.c.l.b16 %v351
        %v384 = vpack.c.b16 %v381, %v380
        %v385 = vpack.c.b16 %v383, %v382
        %v387 = vsel %vm295, %v384, 0
        %v390 = vsel %vm295, %v385, 0
        %392 = vmatprep.subr.bf16.mxu0 %v347
        %393 = vmatpush1.bf16.msra.mxu0 %v346
        %394 = vmatprep.subr.bf16.mxu0 0
        %395 = vmatpush1.bf16.msra.mxu0 0
        %396 = vmatprep.subr.bf16.mxu0 0
        %397 = vmatpush1.bf16.msra.mxu0 0
        %398 = vmatprep.subr.bf16.mxu0 0
        %399 = vmatpush1.bf16.msra.mxu0 0
        %400 = vmatprep.subr.bf16.mxu0 0
        %401 = vmatpush1.bf16.msra.mxu0 0
        %402 = vmatprep.subr.bf16.mxu0 0
        %403 = vmatpush1.bf16.msra.mxu0 0
        %404 = vmatprep.subr.bf16.mxu0 0
        %405 = vmatpush1.bf16.msra.mxu0 0
        %406 = vmatprep.subr.bf16.mxu0 0
        %407 = vmatpush1.bf16.msra.mxu0 0
        %408 = vmatprep.subr.bf16.mxu0 0
        %409 = vmatpush1.bf16.msra.mxu0 0
        %410 = vmatprep.subr.bf16.mxu0 0
        %411 = vmatpush1.bf16.msra.mxu0 0
        %412 = vmatprep.subr.bf16.mxu0 0
        %413 = vmatpush1.bf16.msra.mxu0 0
        %414 = vmatprep.subr.bf16.mxu0 0
        %415 = vmatpush1.bf16.msra.mxu0 0
        %416 = vmatprep.subr.bf16.mxu0 0
        %417 = vmatpush1.bf16.msra.mxu0 0
        %418 = vmatprep.subr.bf16.mxu0 0
        %419 = vmatpush1.bf16.msra.mxu0 0
        %420 = vmatprep.subr.bf16.mxu0 0
        %421 = vmatpush1.bf16.msra.mxu0 0
        %422 = vmatprep.subr.bf16.mxu0 0
        %423 = vmatpush1.bf16.msra.mxu0 0
        %424 = vmatprep.mubr.bf16.mxu0 0
        %425 = vmatmul.mubr.bf16.gmra.mrb[0].mxu0 %v387
        %v426 = vpop.f32.mrb[0].mxu0
        %v427 = vadd.f32 %v359, %v426
        %v428 = vpop.f32.mrb[0].mxu0
        %v429 = vadd.f32 %v359, %v428
        %v430 = vpop.f32.mrb[0].mxu0
        %v431 = vadd.f32 %v364, %v430
        %v432 = vpop.f32.mrb[0].mxu0
        %v433 = vadd.f32 %v364, %v432
        %434 = vmatprep.mubr.bf16.mxu0 0
        %435 = vmatmul.mubr.bf16.gmra.mrb[0].mxu0 %v390
        %v436 = vpop.f32.mrb[0].mxu0
        %v437 = vadd.f32 %v369, %v436
        %v438 = vpop.f32.mrb[0].mxu0
        %v439 = vadd.f32 %v369, %v438
        %v440 = vpop.f32.mrb[0].mxu0
        %v441 = vadd.f32 %v374, %v440
        %v442 = vpop.f32.mrb[0].mxu0
        %v443 = vadd.f32 %v374, %v442
        %444 = vdwg.mxu0
        %445 = vst [vmem:[%s257] sm:$0xff] %v427
        %446 = vst [vmem:[%s257 + $0x8] sm:$0xff] %v429
        %447 = vst [vmem:[%s257 + $0x10] sm:$0xff] %v431
        %448 = vst [vmem:[%s257 + $0x18] sm:$0xff] %v433
        %449 = vst [vmem:[%s257 + $0x20] sm:$0xff] %v437
        %450 = vst [vmem:[%s257 + $0x28] sm:$0xff] %v439
        %451 = vst [vmem:[%s257 + $0x30] sm:$0xff] %v441
        %452 = vst [vmem:[%s257 + $0x38] sm:$0xff] %v443
        %s453 = sand.u32 %s154, 1
        %s454 = scalar_lea.sflag [#allocation4], %s453
        %s455 = sand.u32 %s154, 1
        %s456 = smul.addr %s455, 64
        %s457 = scalar_lea.vmem [#allocation5], %s456
        // Predicated region
        $region45: #{tpu_custom_call.1} parent=39 // pred_check
          %p458 = pneg %p164
        $region46: #{tpu_custom_call.1} parent=39 // pred_check_branch
          %460 = sbr.rel (%p458) target = $region48
        $region47: #{tpu_custom_call.1} parent=39 // pred_region
          %s461 = smul.u32 2, %s25
          %s463 = ssub.s32 1024, 1024
          %464 = vsyncadd %s454, %s463
          %s465 = smul.addr %s24, 8
          %s466 = sadd.s32 %s461, %s465
          %s467 = smul.addr %s466, 128
          %s468 = scalar_lea.hbm %s5, %s467
          %s469 = sshll.u32 %s457, 4
          %s470 = int_to_ptr.vmem [resolvable:$true] %s469
          %475 = dma.vmem_to_hbm [thread:$0]  %s470, 1024, %s468, %s454, 256, 256, 16
        $region48: #{tpu_custom_call.1} parent=39 // pred_fallthru
          _
      $region40: #{tpu_custom_call.1} parent=5 // pred_fallthru
        _
      %p476 = scmp.le.s32.totalorder 2, %s15
      // Predicated region
      $region49: #{tpu_custom_call.1} parent=5 // pred_check
        %p477 = pneg %p476
      $region50: #{tpu_custom_call.1} parent=5 // pred_check_branch
        %479 = sbr.rel (%p477) target = $region52
      $region51: #{tpu_custom_call.1} parent=5 // pred_region
        %s480 = ssub.s32 %s15, 2
        // Predicated region
        $region53: #{tpu_custom_call.1} parent=51 // pred_check
          %p481 = pneg %p170
        $region54: #{tpu_custom_call.1} parent=51 // pred_check_branch
          %483 = sbr.rel (%p481) target = $region56
        $region55: #{tpu_custom_call.1} parent=51 // pred_region
          %s484 = sand.u32 %s155, 1
          %s485 = scalar_lea.sflag [#allocation4], %s484
          %s486 = sand.u32 %s155, 1
          %s487 = smul.addr %s486, 64
          %s488 = scalar_lea.vmem [#allocation5], %s487
          %489 = dma.done %s485, 1024
        $region56: #{tpu_custom_call.1} parent=51 // pred_fallthru
          _
      $region52: #{tpu_custom_call.1} parent=5 // pred_fallthru
        _
    $region6: #{tpu_custom_call.1} parent=1 // loop_footer
      %s19 = sadd.s32 1, %s15
    $region7: #{tpu_custom_call.1} parent=1 // loop_footer_branch
      %14 = sbr.rel target = $region3
    $region8: #{tpu_custom_call.1} parent=1 // loop_exit
      _
    %490 = vsyncpa [#allocation3], 1
    %s491 = scalar_lea.sflag [#allocation3], 1
    %492 = vsyncpa %s491, 1
    %493 = vsyncpa [#allocation4], 1
    %s494 = scalar_lea.sflag [#allocation4], 1
    %495 = vsyncpa %s494, 1

</llo_original>
